<compile_context>
chip_gen: v6e
topology: v6e:2x2x1
jax: 0.10.0
libtpu: 0.0.40
codegen_flags: <defaults>
</compile_context>

<pallas_src>
import functools

import jax
import jax.numpy as jnp
from jax.experimental import pallas as pl
from jax.experimental.pallas import tpu as pltpu


def _round_up(x, m):
    return ((x + m - 1) // m) * m


def mlp_kernel(x_ref, w1_ref, b1_ref, w2_ref, b2_ref, o_ref):
    # Hot path: two bf16 MXU matmuls (f32 accumulate) + f32 VPU bias/ReLU.
    x = x_ref[...]                                                 # (tm, D_in) bf16
    h = jnp.dot(x, w1_ref[...], preferred_element_type=jnp.float32)
    h = jnp.maximum(h + b1_ref[...], 0.0)                          # f32 bias + ReLU
    y = jnp.dot(h.astype(w2_ref.dtype), w2_ref[...],
                preferred_element_type=jnp.float32)
    o_ref[...] = (y + b2_ref[...]).astype(o_ref.dtype)             # f32 bias, cast out


@functools.partial(jax.jit, static_argnames=("tm",))
def music_encoder(x, w1, b1, w2, b2, *, tm=512):
    """x: (..., input_dim) -> (..., output_dim), matching the PyTorch MLP."""
    orig_shape = x.shape
    d_in = orig_shape[-1]
    d_hidden = w1.shape[1]
    d_out = w2.shape[1]

    x2 = x.reshape(-1, d_in)                                       # (N, D_in)
    n = x2.shape[0]

    # Row tile: multiple of 16 (bf16 sublane packing), no larger than needed.
    tm_eff = max(16, min(tm, _round_up(n, 16)))
    tm_eff = _round_up(tm_eff, 16)
    grid = (pl.cdiv(n, tm_eff),)                                   # partial last tile OK

    compute_dtype = jnp.bfloat16
    x2c = x2.astype(compute_dtype)
    w1c = w1.astype(compute_dtype)
    w2c = w2.astype(compute_dtype)
    b1_2d = b1.reshape(1, d_hidden).astype(jnp.float32)
    b2_2d = b2.reshape(1, d_out).astype(jnp.float32)

    flops = 2 * n * (d_in * d_hidden + d_hidden * d_out)
    bytes_accessed = (
        n * d_in * x2c.dtype.itemsize
        + d_in * d_hidden * w1c.dtype.itemsize
        + d_hidden * d_out * w2c.dtype.itemsize
        + (d_hidden + d_out) * 4
        + n * d_out * x.dtype.itemsize
    )

    out = pl.pallas_call(
        mlp_kernel,
        out_shape=jax.ShapeDtypeStruct((n, d_out), x.dtype),
        grid_spec=pltpu.PrefetchScalarGridSpec(
            num_scalar_prefetch=0,
            grid=grid,
            in_specs=[
                pl.BlockSpec((tm_eff, d_in), lambda i: (i, 0)),        # x row tile (streamed)
                pl.BlockSpec((d_in, d_hidden), lambda i: (0, 0)),      # W1 (resident)
                pl.BlockSpec((1, d_hidden), lambda i: (0, 0)),         # b1 (resident)
                pl.BlockSpec((d_hidden, d_out), lambda i: (0, 0)),     # W2 (resident)
                pl.BlockSpec((1, d_out), lambda i: (0, 0)),            # b2 (resident)
            ],
            out_specs=pl.BlockSpec((tm_eff, d_out), lambda i: (i, 0)),
        ),
        compiler_params=pltpu.CompilerParams(
            dimension_semantics=("parallel",)),
        cost_estimate=pl.CostEstimate(
            flops=flops, transcendentals=0, bytes_accessed=bytes_accessed),
    )(x2c, w1c, b1_2d, w2c, b2_2d)

    return out.reshape(*orig_shape[:-1], d_out)


def init_params(key, input_dim=128, hidden_dim=256, output_dim=128,
                dtype=jnp.float32):
    """Deterministic init mimicking nn.Linear's U(-1/sqrt(fan_in), 1/sqrt(fan_in))."""
    k1, k2, k3, k4 = jax.random.split(key, 4)
    s1 = 1.0 / jnp.sqrt(input_dim)
    s2 = 1.0 / jnp.sqrt(hidden_dim)
    # stored as (in_features, out_features) = PyTorch weight transposed
    w1 = jax.random.uniform(k1, (input_dim, hidden_dim), dtype, -s1, s1)
    b1 = jax.random.uniform(k2, (hidden_dim,), dtype, -s1, s1)
    w2 = jax.random.uniform(k3, (hidden_dim, output_dim), dtype, -s2, s2)
    b2 = jax.random.uniform(k4, (output_dim,), dtype, -s2, s2)
    return w1, b1, w2, b2


if __name__ == "__main__":
    key = jax.random.PRNGKey(0)
    kx, kp = jax.random.split(key)

    input_dim, hidden_dim, output_dim = 128, 256, 128
    batch, seq = 2, 8

    x = jax.random.normal(kx, (batch, seq, input_dim), dtype=jnp.float32)
    w1, b1, w2, b2 = init_params(kp, input_dim, hidden_dim, output_dim)

    y = music_encoder(x, w1, b1, w2, b2)
    y = jax.block_until_ready(y)
    assert y.shape == (batch, seq, output_dim)

    # Reference with the same bf16-operand / f32-accumulate recipe.
    x2 = x.reshape(-1, input_dim)
    h_ref = jnp.maximum(
        jnp.dot(x2.astype(jnp.bfloat16), w1.astype(jnp.bfloat16),
                preferred_element_type=jnp.float32) + b1, 0.0)
    y_ref_bf16 = (jnp.dot(h_ref.astype(jnp.bfloat16), w2.astype(jnp.bfloat16),
                          preferred_element_type=jnp.float32) + b2
                  ).reshape(batch, seq, output_dim)
    assert jnp.allclose(y, y_ref_bf16, atol=1e-3, rtol=1e-3), (
        float(jnp.max(jnp.abs(y - y_ref_bf16))))

    # Looser sanity check vs. the pure f32 math of the original module.
    h32 = jnp.maximum(x2 @ w1 + b1, 0.0)
    y_ref_f32 = (h32 @ w2 + b2).reshape(batch, seq, output_dim)
    assert jnp.allclose(y, y_ref_f32, atol=5e-2, rtol=5e-2)

    # Also exercise a non-tile-multiple row count to validate partial blocks.
    x_odd = jax.random.normal(kx, (3, 7, input_dim), dtype=jnp.float32)
    y_odd = jax.block_until_ready(music_encoder(x_odd, w1, b1, w2, b2))
    h_odd = jnp.maximum(x_odd.reshape(-1, input_dim) @ w1 + b1, 0.0)
    y_odd_ref = (h_odd @ w2 + b2).reshape(3, 7, output_dim)
    assert jnp.allclose(y_odd, y_odd_ref, atol=5e-2, rtol=5e-2)

    print("KERNEL_OK")
</pallas_src>

<mosaic_0001>
module attributes {stable_mosaic.version = 11 : i64} {
  func.func @mlp_kernel(%arg0: i32, %arg1: memref<16x128xbf16, #tpu.memory_space<vmem>>, %arg2: memref<128x256xbf16, #tpu.memory_space<vmem>>, %arg3: memref<1x256xf32, #tpu.memory_space<vmem>>, %arg4: memref<256x128xbf16, #tpu.memory_space<vmem>>, %arg5: memref<1x128xf32, #tpu.memory_space<vmem>>, %arg6: memref<16x128xf32, #tpu.memory_space<vmem>>) attributes {dimension_semantics = [#tpu.dimension_semantics<parallel>], iteration_bounds = array<i64: 1>, scalar_prefetch = 0 : i64, scratch_operands = 0 : i64, tpu.core_type = #tpu.core_type<tc>, window_params = [{transform_indices = @transform_0, window_bounds = array<i64: 16, 128>}, {pipeline_mode = #tpu.pipeline_mode<synchronous>, transform_indices = @transform_1, window_bounds = array<i64: 128, 256>}, {pipeline_mode = #tpu.pipeline_mode<synchronous>, transform_indices = @transform_2, window_bounds = array<i64: 1, 256>}, {pipeline_mode = #tpu.pipeline_mode<synchronous>, transform_indices = @transform_3, window_bounds = array<i64: 256, 128>}, {pipeline_mode = #tpu.pipeline_mode<synchronous>, transform_indices = @transform_4, window_bounds = array<i64: 1, 128>}, {transform_indices = @transform_5, window_bounds = array<i64: 16, 128>}]} {
    %c0 = arith.constant 0 : index
    %c0_0 = arith.constant 0 : index
    %0 = vector.load %arg1[%c0, %c0_0] : memref<16x128xbf16, #tpu.memory_space<vmem>>, vector<16x128xbf16>
    %c0_1 = arith.constant 0 : index
    %c0_2 = arith.constant 0 : index
    %1 = vector.load %arg2[%c0_1, %c0_2] : memref<128x256xbf16, #tpu.memory_space<vmem>>, vector<128x256xbf16>
    %cst = arith.constant dense<0.000000e+00> : vector<16x256xf32>
    %2 = tpu.matmul %0, %1, %cst {dimension_numbers = #tpu.dot_dimension_numbers<[1], [0], [0], [1], [0, 0, 1, 1], [], []>} : vector<16x128xbf16>, vector<128x256xbf16>, vector<16x256xf32> -> vector<16x256xf32>
    %c0_3 = arith.constant 0 : index
    %c0_4 = arith.constant 0 : index
    %3 = vector.load %arg3[%c0_3, %c0_4] : memref<1x256xf32, #tpu.memory_space<vmem>>, vector<1x256xf32>
    %4 = vector.broadcast %3 : vector<1x256xf32> to vector<16x256xf32>
    %5 = arith.addf %2, %4 : vector<16x256xf32>
    %cst_5 = arith.constant 0.000000e+00 : f32
    %6 = vector.broadcast %cst_5 : f32 to vector<16x256xf32>
    %7 = arith.maximumf %5, %6 : vector<16x256xf32>
    %8 = arith.truncf %7 : vector<16x256xf32> to vector<16x256xbf16>
    %c0_6 = arith.constant 0 : index
    %c0_7 = arith.constant 0 : index
    %9 = vector.load %arg4[%c0_6, %c0_7] : memref<256x128xbf16, #tpu.memory_space<vmem>>, vector<256x128xbf16>
    %cst_8 = arith.constant dense<0.000000e+00> : vector<16x128xf32>
    %10 = tpu.matmul %8, %9, %cst_8 {dimension_numbers = #tpu.dot_dimension_numbers<[1], [0], [0], [1], [0, 0, 1, 1], [], []>} : vector<16x256xbf16>, vector<256x128xbf16>, vector<16x128xf32> -> vector<16x128xf32>
    %c0_9 = arith.constant 0 : index
    %c0_10 = arith.constant 0 : index
    %11 = vector.load %arg5[%c0_9, %c0_10] : memref<1x128xf32, #tpu.memory_space<vmem>>, vector<1x128xf32>
    %12 = vector.broadcast %11 : vector<1x128xf32> to vector<16x128xf32>
    %13 = arith.addf %10, %12 : vector<16x128xf32>
    %c0_11 = arith.constant 0 : index
    %c0_12 = arith.constant 0 : index
    %14 = vector.load %arg6[%c0_11, %c0_12] : memref<16x128xf32, #tpu.memory_space<vmem>>, vector<16x128xf32>
    tpu.vector_store %arg6[%c0_11, %c0_12], %13 {strides = array<i32>} : memref<16x128xf32, #tpu.memory_space<vmem>>, vector<16x128xf32>,
    return
  }
  func.func @transform_0(%arg0: i32) -> (i32, i32) {
    %c0_i32 = arith.constant 0 : i32
    %c0_i32_0 = arith.constant 0 : i32
    return %arg0, %c0_i32 : i32, i32
  }
  func.func @transform_1(%arg0: i32) -> (i32, i32) {
    %c0_i32 = arith.constant 0 : i32
    %c0_i32_0 = arith.constant 0 : i32
    %c0_i32_1 = arith.constant 0 : i32
    return %c0_i32, %c0_i32_0 : i32, i32
  }
  func.func @transform_2(%arg0: i32) -> (i32, i32) {
    %c0_i32 = arith.constant 0 : i32
    %c0_i32_0 = arith.constant 0 : i32
    %c0_i32_1 = arith.constant 0 : i32
    return %c0_i32, %c0_i32_0 : i32, i32
  }
  func.func @transform_3(%arg0: i32) -> (i32, i32) {
    %c0_i32 = arith.constant 0 : i32
    %c0_i32_0 = arith.constant 0 : i32
    %c0_i32_1 = arith.constant 0 : i32
    return %c0_i32, %c0_i32_0 : i32, i32
  }
  func.func @transform_4(%arg0: i32) -> (i32, i32) {
    %c0_i32 = arith.constant 0 : i32
    %c0_i32_0 = arith.constant 0 : i32
    %c0_i32_1 = arith.constant 0 : i32
    return %c0_i32, %c0_i32_0 : i32, i32
  }
  func.func @transform_5(%arg0: i32) -> (i32, i32) {
    %c0_i32 = arith.constant 0 : i32
    %c0_i32_0 = arith.constant 0 : i32
    return %arg0, %c0_i32 : i32, i32
  }
}

</mosaic_0001>

<llo_original>
// kernel: music_encoder.1
$region0: #{music_encoder.1}
  #allocation0 [shape = 'u32[]', space=smem, size = 0x4, offset = 0x4, fixed_abs, tag = 'smem constant byte address 0x4 - core index']
  #allocation1 [shape = 'u32[144,128]{1,0:T(1,128)}', space=vmem, size = 0x12000, scoped, tag = 'internal scratch']
  %s0 = inlined_call_operand.vmem [shape: bf16[16,128], index: 0, kind: input, shape index: {}]
  %s1 = inlined_call_operand.vmem [shape: bf16[128,256], index: 1, kind: input, shape index: {}]
  %s2 = inlined_call_operand.vmem [shape: f32[1,256], index: 2, kind: input, shape index: {}]
  %s3 = inlined_call_operand.vmem [shape: bf16[256,128], index: 3, kind: input, shape index: {}]
  %s4 = inlined_call_operand.vmem [shape: f32[1,128], index: 4, kind: input, shape index: {}]
  %s5 = inlined_call_operand.hbm [shape: f32[16,128], index: 5, kind: output, shape index: {}]
  %s6 = sld [smem:[#allocation0]]
  $region30: #{music_encoder.1} parent=0
    _
  %s8 = ssub.s32 1, %s6
  %s9 = scalar_select 0, %s8, %s6
  $region1: #{music_encoder.1} parent=0
    #allocation2 [shape = 'u8[8192]{0}', space=vmem, size = 0x2000, scoped, tag = 'output window, operand 0, single buffered']
    #allocation3 [shape = 's32[1]{0}', space=sflag, size = 0x4, scoped, tag = 'scoped memory for music_encoder.1']
    %10 = vsyncpa [#allocation3], 0
    // Predicated region
    $region2: #{music_encoder.1} parent=1 // pred_check
      _
    $region3: #{music_encoder.1} parent=1 // pred_check_branch
      %12 = sbr.rel (0) target = $region5
    $region4: #{music_encoder.1} parent=1 // pred_region
      _
    $region5: #{music_encoder.1} parent=1 // pred_fallthru
      _
    // Predicated region
    $region6: #{music_encoder.1} parent=1 // pred_check
      _
    $region7: #{music_encoder.1} parent=1 // pred_check_branch
      %14 = sbr.rel (0) target = $region9
    $region8: #{music_encoder.1} parent=1 // pred_region
      _
    $region9: #{music_encoder.1} parent=1 // pred_fallthru
      _
    // Predicated region
    $region10: #{music_encoder.1} parent=1 // pred_check
      _
    $region11: #{music_encoder.1} parent=1 // pred_check_branch
      %16 = sbr.rel (0) target = $region13
    $region12: #{music_encoder.1} parent=1 // pred_region
      _
    $region13: #{music_encoder.1} parent=1 // pred_fallthru
      _
    // Predicated region
    $region14: #{music_encoder.1} parent=1 // pred_check
      _
    $region15: #{music_encoder.1} parent=1 // pred_check_branch
      %18 = sbr.rel (0) target = $region17
    $region16: #{music_encoder.1} parent=1 // pred_region
      _
    $region17: #{music_encoder.1} parent=1 // pred_fallthru
      _
    // Predicated region
    $region18: #{music_encoder.1} parent=1 // pred_check
      _
    $region19: #{music_encoder.1} parent=1 // pred_check_branch
      %20 = sbr.rel (0) target = $region21
    $region20: #{music_encoder.1} parent=1 // pred_region
      _
    $region21: #{music_encoder.1} parent=1 // pred_fallthru
      _
    %v22 = vld [vmem:[%s0] sm:$0xf]
    %v23 = vld [vmem:[%s0 + $0x4] sm:$0xf]
    %v24 = vld [vmem:[%s1] sm:$0xff]
    %v25 = vld [vmem:[%s1 + $0x8] sm:$0xff]
    %v26 = vld [vmem:[%s1 + $0x10] sm:$0xff]
    %v27 = vld [vmem:[%s1 + $0x18] sm:$0xff]
    %v28 = vld [vmem:[%s1 + $0x20] sm:$0xff]
    %v29 = vld [vmem:[%s1 + $0x28] sm:$0xff]
    %v30 = vld [vmem:[%s1 + $0x30] sm:$0xff]
    %v31 = vld [vmem:[%s1 + $0x38] sm:$0xff]
    %v32 = vld [vmem:[%s1 + $0x40] sm:$0xff]
    %v33 = vld [vmem:[%s1 + $0x48] sm:$0xff]
    %v34 = vld [vmem:[%s1 + $0x50] sm:$0xff]
    %v35 = vld [vmem:[%s1 + $0x58] sm:$0xff]
    %v36 = vld [vmem:[%s1 + $0x60] sm:$0xff]
    %v37 = vld [vmem:[%s1 + $0x68] sm:$0xff]
    %v38 = vld [vmem:[%s1 + $0x70] sm:$0xff]
    %v39 = vld [vmem:[%s1 + $0x78] sm:$0xff]
    %v40 = vld [vmem:[%s2] sm:$0x3]
    %v42 = vlaneseq
    %v43 = vshrl.u32 %v42, 7
    %v44 = vsub.s32 0, %v43
    %v45 = vrot.slane %v40, %v44
    %v46 = vlaneseq
    %v47 = vshrl.u32 %v46, 7
    %v48 = vsub.s32 1, %v47
    %v49 = vrot.slane %v40, %v48
    %v54 = vunpack.c.l.b16 %v22
    %v55 = vunpack.c.l.b16 %v23
    %v56 = vpack.c.b16 %v55, %v54
    %v74 = vunpack.c.l.b16 %v24
    %v75 = vunpack.c.h.b16 %v24
    %v76 = vunpack.c.l.b16 %v25
    %v77 = vunpack.c.h.b16 %v25
    %v78 = vunpack.c.l.b16 %v26
    %v79 = vunpack.c.h.b16 %v26
    %v80 = vunpack.c.l.b16 %v27
    %v81 = vunpack.c.h.b16 %v27
    %v82 = vunpack.c.l.b16 %v28
    %v83 = vunpack.c.h.b16 %v28
    %v84 = vunpack.c.l.b16 %v29
    %v85 = vunpack.c.h.b16 %v29
    %v86 = vunpack.c.l.b16 %v30
    %v87 = vunpack.c.h.b16 %v30
    %v88 = vunpack.c.l.b16 %v31
    %v89 = vunpack.c.h.b16 %v31
    %v90 = vunpack.c.l.b16 %v32
    %v91 = vunpack.c.h.b16 %v32
    %v92 = vunpack.c.l.b16 %v33
    %v93 = vunpack.c.h.b16 %v33
    %v94 = vunpack.c.l.b16 %v34
    %v95 = vunpack.c.h.b16 %v34
    %v96 = vunpack.c.l.b16 %v35
    %v97 = vunpack.c.h.b16 %v35
    %v98 = vunpack.c.l.b16 %v36
    %v99 = vunpack.c.h.b16 %v36
    %v100 = vunpack.c.l.b16 %v37
    %v101 = vunpack.c.h.b16 %v37
    %v102 = vunpack.c.l.b16 %v38
    %v103 = vunpack.c.h.b16 %v38
    %v104 = vunpack.c.l.b16 %v39
    %v105 = vunpack.c.h.b16 %v39
    %v106 = vpack.c.b16 %v76, %v74
    %v107 = vpack.c.b16 %v77, %v75
    %v108 = vpack.c.b16 %v80, %v78
    %v109 = vpack.c.b16 %v81, %v79
    %v110 = vpack.c.b16 %v84, %v82
    %v111 = vpack.c.b16 %v85, %v83
    %v112 = vpack.c.b16 %v88, %v86
    %v113 = vpack.c.b16 %v89, %v87
    %v114 = vpack.c.b16 %v92, %v90
    %v115 = vpack.c.b16 %v93, %v91
    %v116 = vpack.c.b16 %v96, %v94
    %v117 = vpack.c.b16 %v97, %v95
    %v118 = vpack.c.b16 %v100, %v98
    %v119 = vpack.c.b16 %v101, %v99
    %v120 = vpack.c.b16 %v104, %v102
    %v121 = vpack.c.b16 %v105, %v103
    %138 = vmatprep.subr.bf16.mxu0 %v121
    %139 = vmatpush1.bf16.msra.mxu0 %v120
    %140 = vmatprep.subr.bf16.mxu0 %v119
    %141 = vmatpush1.bf16.msra.mxu0 %v118
    %142 = vmatprep.subr.bf16.mxu0 %v117
    %143 = vmatpush1.bf16.msra.mxu0 %v116
    %144 = vmatprep.subr.bf16.mxu0 %v115
    %145 = vmatpush1.bf16.msra.mxu0 %v114
    %146 = vmatprep.subr.bf16.mxu0 %v113
    %147 = vmatpush1.bf16.msra.mxu0 %v112
    %148 = vmatprep.subr.bf16.mxu0 %v111
    %149 = vmatpush1.bf16.msra.mxu0 %v110
    %150 = vmatprep.subr.bf16.mxu0 %v109
    %151 = vmatpush1.bf16.msra.mxu0 %v108
    %152 = vmatprep.subr.bf16.mxu0 %v107
    %153 = vmatpush1.bf16.msra.mxu0 %v106
    %154 = vmatprep.subr.bf16.mxu0 0
    %155 = vmatpush2.bf16.msra.mxu0 0
    %156 = vmatprep.subr.bf16.mxu0 0
    %157 = vmatpush2.bf16.msra.mxu0 0
    %158 = vmatprep.subr.bf16.mxu0 0
    %159 = vmatpush2.bf16.msra.mxu0 0
    %160 = vmatprep.subr.bf16.mxu0 0
    %161 = vmatpush2.bf16.msra.mxu0 0
    %162 = vmatprep.subr.bf16.mxu0 0
    %163 = vmatpush2.bf16.msra.mxu0 0
    %164 = vmatprep.subr.bf16.mxu0 0
    %165 = vmatpush2.bf16.msra.mxu0 0
    %166 = vmatprep.subr.bf16.mxu0 0
    %167 = vmatpush2.bf16.msra.mxu0 0
    %168 = vmatprep.subr.bf16.mxu0 0
    %169 = vmatpush2.bf16.msra.mxu0 0
    %170 = vmatprep.mubr.bf16.mxu0 0
    %171 = vmatmul.mubr.bf16.gmra.mxu0 %v56
    %v172 = vpop.f32.mrf.mxu0
    %v173 = vadd.f32 %v45, %v172
    %v174 = vpop.f32.mrf.mxu0
    %v175 = vadd.f32 %v49, %v174
    %v176 = vpop.f32.mrf.mxu0
    %v177 = vadd.f32 %v45, %v176
    %v178 = vpop.f32.mrf.mxu0
    %v179 = vadd.f32 %v49, %v178
    %180 = vdwg.mxu0
    %v181 = vmax.f32 %v173, 0.0
    %v182 = vmax.f32 %v175, 0.0
    %v183 = vmax.f32 %v177, 0.0
    %v184 = vmax.f32 %v179, 0.0
    %v185 = vpack.c.bf16 %v183, %v181
    %v186 = vpack.c.bf16 %v184, %v182
    %v187 = vld [vmem:[%s3] sm:$0xf]
    %v188 = vld [vmem:[%s3 + $0x4] sm:$0xf]
    %v189 = vld [vmem:[%s3 + $0x8] sm:$0xf]
    %v190 = vld [vmem:[%s3 + $0xc] sm:$0xf]
    %v191 = vld [vmem:[%s3 + $0x10] sm:$0xf]
    %v192 = vld [vmem:[%s3 + $0x14] sm:$0xf]
    %v193 = vld [vmem:[%s3 + $0x18] sm:$0xf]
    %v194 = vld [vmem:[%s3 + $0x1c] sm:$0xf]
    %v195 = vld [vmem:[%s3 + $0x20] sm:$0xf]
    %v196 = vld [vmem:[%s3 + $0x24] sm:$0xf]
    %v197 = vld [vmem:[%s3 + $0x28] sm:$0xf]
    %v198 = vld [vmem:[%s3 + $0x2c] sm:$0xf]
    %v199 = vld [vmem:[%s3 + $0x30] sm:$0xf]
    %v200 = vld [vmem:[%s3 + $0x34] sm:$0xf]
    %v201 = vld [vmem:[%s3 + $0x38] sm:$0xf]
    %v202 = vld [vmem:[%s3 + $0x3c] sm:$0xf]
    %v203 = vld [vmem:[%s3 + $0x40] sm:$0xf]
    %v204 = vld [vmem:[%s3 + $0x44] sm:$0xf]
    %v205 = vld [vmem:[%s3 + $0x48] sm:$0xf]
    %v206 = vld [vmem:[%s3 + $0x4c] sm:$0xf]
    %v207 = vld [vmem:[%s3 + $0x50] sm:$0xf]
    %v208 = vld [vmem:[%s3 + $0x54] sm:$0xf]
    %v209 = vld [vmem:[%s3 + $0x58] sm:$0xf]
    %v210 = vld [vmem:[%s3 + $0x5c] sm:$0xf]
    %v211 = vld [vmem:[%s3 + $0x60] sm:$0xf]
    %v212 = vld [vmem:[%s3 + $0x64] sm:$0xf]
    %v213 = vld [vmem:[%s3 + $0x68] sm:$0xf]
    %v214 = vld [vmem:[%s3 + $0x6c] sm:$0xf]
    %v215 = vld [vmem:[%s3 + $0x70] sm:$0xf]
    %v216 = vld [vmem:[%s3 + $0x74] sm:$0xf]
    %v217 = vld [vmem:[%s3 + $0x78] sm:$0xf]
    %v218 = vld [vmem:[%s3 + $0x7c] sm:$0xf]
    %v219 = vld [vmem:[%s4] sm:$0x1]
    %v221 = vlaneseq
    %v222 = vshrl.u32 %v221, 7
    %v223 = vsub.s32 0, %v222
    %v224 = vrot.slane %v219, %v223
    %v258 = vunpack.c.l.b16 %v187
    %v259 = vunpack.c.l.b16 %v188
    %v260 = vunpack.c.l.b16 %v189
    %v261 = vunpack.c.l.b16 %v190
    %v262 = vunpack.c.l.b16 %v191
    %v263 = vunpack.c.l.b16 %v192
    %v264 = vunpack.c.l.b16 %v193
    %v265 = vunpack.c.l.b16 %v194
    %v266 = vunpack.c.l.b16 %v195
    %v267 = vunpack.c.l.b16 %v196
    %v268 = vunpack.c.l.b16 %v197
    %v269 = vunpack.c.l.b16 %v198
    %v270 = vunpack.c.l.b16 %v199
    %v271 = vunpack.c.l.b16 %v200
    %v272 = vunpack.c.l.b16 %v201
    %v273 = vunpack.c.l.b16 %v202
    %v274 = vunpack.c.l.b16 %v203
    %v275 = vunpack.c.l.b16 %v204
    %v276 = vunpack.c.l.b16 %v205
    %v277 = vunpack.c.l.b16 %v206
    %v278 = vunpack.c.l.b16 %v207
    %v279 = vunpack.c.l.b16 %v208
    %v280 = vunpack.c.l.b16 %v209
    %v281 = vunpack.c.l.b16 %v210
    %v282 = vunpack.c.l.b16 %v211
    %v283 = vunpack.c.l.b16 %v212
    %v284 = vunpack.c.l.b16 %v213
    %v285 = vunpack.c.l.b16 %v214
    %v286 = vunpack.c.l.b16 %v215
    %v287 = vunpack.c.l.b16 %v216
    %v288 = vunpack.c.l.b16 %v217
    %v289 = vunpack.c.l.b16 %v218
    %v290 = vpack.c.b16 %v259, %v258
    %v291 = vpack.c.b16 %v261, %v260
    %v292 = vpack.c.b16 %v263, %v262
    %v293 = vpack.c.b16 %v265, %v264
    %v294 = vpack.c.b16 %v267, %v266
    %v295 = vpack.c.b16 %v269, %v268
    %v296 = vpack.c.b16 %v271, %v270
    %v297 = vpack.c.b16 %v273, %v272
    %v298 = vpack.c.b16 %v275, %v274
    %v299 = vpack.c.b16 %v277, %v276
    %v300 = vpack.c.b16 %v279, %v278
    %v301 = vpack.c.b16 %v281, %v280
    %v302 = vpack.c.b16 %v283, %v282
    %v303 = vpack.c.b16 %v285, %v284
    %v304 = vpack.c.b16 %v287, %v286
    %v305 = vpack.c.b16 %v289, %v288
    %322 = vmatprep.subr.bf16.mxu0 0
    %323 = vmatpush1.bf16.msra.mxu0 %v297
    %324 = vmatprep.subr.bf16.mxu0 0
    %325 = vmatpush1.bf16.msra.mxu0 %v296
    %326 = vmatprep.subr.bf16.mxu0 0
    %327 = vmatpush1.bf16.msra.mxu0 %v295
    %328 = vmatprep.subr.bf16.mxu0 0
    %329 = vmatpush1.bf16.msra.mxu0 %v294
    %330 = vmatprep.subr.bf16.mxu0 0
    %331 = vmatpush1.bf16.msra.mxu0 %v293
    %332 = vmatprep.subr.bf16.mxu0 0
    %333 = vmatpush1.bf16.msra.mxu0 %v292
    %334 = vmatprep.subr.bf16.mxu0 0
    %335 = vmatpush1.bf16.msra.mxu0 %v291
    %336 = vmatprep.subr.bf16.mxu0 0
    %337 = vmatpush1.bf16.msra.mxu0 %v290
    %338 = vmatprep.subr.bf16.mxu0 0
    %339 = vmatpush2.bf16.msra.mxu0 %v305
    %340 = vmatprep.subr.bf16.mxu0 0
    %341 = vmatpush2.bf16.msra.mxu0 %v304
    %342 = vmatprep.subr.bf16.mxu0 0
    %343 = vmatpush2.bf16.msra.mxu0 %v303
    %344 = vmatprep.subr.bf16.mxu0 0
    %345 = vmatpush2.bf16.msra.mxu0 %v302
    %346 = vmatprep.subr.bf16.mxu0 0
    %347 = vmatpush2.bf16.msra.mxu0 %v301
    %348 = vmatprep.subr.bf16.mxu0 0
    %349 = vmatpush2.bf16.msra.mxu0 %v300
    %350 = vmatprep.subr.bf16.mxu0 0
    %351 = vmatpush2.bf16.msra.mxu0 %v299
    %352 = vmatprep.subr.bf16.mxu0 0
    %353 = vmatpush2.bf16.msra.mxu0 %v298
    %354 = vmatprep.mubr.bf16.mxu0 %v186
    %355 = vmatmul.mubr.bf16.gmra.mxu0 %v185
    %v356 = vpop.f32.mrf.mxu0
    %v357 = vadd.f32 %v224, %v356
    %v358 = vpop.f32.mrf.mxu0
    %v359 = vpop.f32.mrf.mxu0
    %v360 = vadd.f32 %v224, %v359
    %v361 = vpop.f32.mrf.mxu0
    %362 = vdwg.mxu0
    %363 = vst [vmem:[#allocation2] sm:$0xff] %v357
    %364 = vst [vmem:[#allocation2 + $0x8] sm:$0xff] %v360
    // Predicated region
    $region22: #{music_encoder.1} parent=1 // pred_check
      _
    $region23: #{music_encoder.1} parent=1 // pred_check_branch
      %366 = sbr.rel (0) target = $region25
    $region24: #{music_encoder.1} parent=1 // pred_region
      %s368 = ssub.s32 256, 256
      %369 = vsyncadd [#allocation3], %s368
      %s370 = sshll.u32 [#allocation2], 4
      %s371 = int_to_ptr.vmem [resolvable:$true] %s370
      %376 = dma.vmem_to_hbm [thread:$0]  %s371, 256, %s5, [#allocation3], 128, 128, 8
    $region25: #{music_encoder.1} parent=1 // pred_fallthru
      _
    // Predicated region
    $region26: #{music_encoder.1} parent=1 // pred_check
      _
    $region27: #{music_encoder.1} parent=1 // pred_check_branch
      %378 = sbr.rel (0) target = $region29
    $region28: #{music_encoder.1} parent=1 // pred_region
      %379 = dma.done [#allocation3], 256
    $region29: #{music_encoder.1} parent=1 // pred_fallthru
      _
    %380 = vsyncpa [#allocation3], 1

</llo_original>
